<compile_context>
chip_gen: v7x
topology: tpu7x:2x2x1
jax: 0.10.0
libtpu: 0.0.40
codegen_flags: <defaults>
</compile_context>

<pallas_src>
import jax
import jax.numpy as jnp
from jax.experimental import pallas as pl
from jax.experimental.pallas import tpu as pltpu


def _mlp_kernel(x_ref,
                w1_ref, b1_ref,
                w2_ref, b2_ref,
                w3_ref, b3_ref,
                w4_ref, b4_ref,
                o_ref):
    # Feature-major fused MLP: every intermediate is (features, TB) so the batch
    # is lane-dense end to end.
    xT = x_ref[...]                                                    # (6,   TB)

    h1 = jnp.dot(w1_ref[...], xT, preferred_element_type=jnp.float32)
    h1 = jnp.maximum(h1 + b1_ref[...], 0.0)                            # (128, TB)

    h2 = jnp.dot(w2_ref[...], h1, preferred_element_type=jnp.float32)
    h2 = jnp.maximum(h2 + b2_ref[...], 0.0)                            # (64,  TB)

    h3 = jnp.dot(w3_ref[...], h2, preferred_element_type=jnp.float32)
    h3 = jnp.maximum(h3 + b3_ref[...], 0.0)                            # (32,  TB)

    h4 = jnp.dot(w4_ref[...], h3, preferred_element_type=jnp.float32)
    h4 = h4 + b4_ref[0, 0]                                             # (1,   TB)

    # sigmoid epilogue (exp goes to EUP; output slab is lane-dense)
    o_ref[...] = jax.nn.sigmoid(h4).astype(o_ref.dtype)


def action_conditioned_ff(x, params, *, tb_max=2048):
    """x: (B, 6) float32.

    params: PyTorch-layout weights w_i of shape (out, in) and biases b_i of
    shape (out, 1), i.e. exactly nn.Linear's weight / bias (bias as a column).
    Returns (B, 1) float32, matching the PyTorch module's forward().
    """
    B = x.shape[0]

    # Batch rides on lanes: round B up to a multiple of 128 lanes, pick a batch
    # tile TB (<= tb_max, multiple of 128; 2048 is safe for v5e/v6e/v7x VMEM),
    # then pad so tiles divide evenly.
    padded_b = pl.cdiv(B, 128) * 128
    tb = min(tb_max, padded_b)
    padded_b = pl.cdiv(padded_b, tb) * tb
    num_tiles = padded_b // tb

    xT = jnp.zeros((6, padded_b), jnp.float32).at[:, :B].set(
        x.astype(jnp.float32).T)

    w1, b1 = params["w1"], params["b1"]
    w2, b2 = params["w2"], params["b2"]
    w3, b3 = params["w3"], params["b3"]
    w4, b4 = params["w4"], params["b4"]

    def resident(shape):
        # Full-array block, same block index every grid step -> stays in VMEM.
        return pl.BlockSpec(shape, lambda i: (0,) * len(shape))

    out = pl.pallas_call(
        _mlp_kernel,
        out_shape=jax.ShapeDtypeStruct((1, padded_b), jnp.float32),
        grid=(num_tiles,),
        in_specs=[
            # x^T streamed in (6, TB) batch tiles (double-buffered by Pallas).
            pl.BlockSpec((6, tb), lambda i: (0, i)),
            resident(w1.shape), resident(b1.shape),
            resident(w2.shape), resident(b2.shape),
            resident(w3.shape), resident(b3.shape),
            resident(w4.shape),
            # b4 is a single scalar -> SMEM, no padded VMEM tile / masked load.
            pl.BlockSpec(memory_space=pltpu.MemorySpace.SMEM),
        ],
        # Lane-dense output: (1, TB) slab per grid step.
        out_specs=pl.BlockSpec((1, tb), lambda i: (0, i)),
        compiler_params=pltpu.CompilerParams(
            dimension_semantics=("parallel",)),
    )(xT, w1, b1, w2, b2, w3, b3, w4, b4)

    return out[0, :B].reshape(B, 1)


def init_params(key):
    """PyTorch-style init: U(-1/sqrt(fan_in), 1/sqrt(fan_in)), nn.Linear layout."""
    sizes = [(6, 128), (128, 64), (64, 32), (32, 1)]
    params = {}
    for i, (fan_in, fan_out) in enumerate(sizes, start=1):
        key, kw, kb = jax.random.split(key, 3)
        bound = 1.0 / jnp.sqrt(jnp.float32(fan_in))
        params[f"w{i}"] = jax.random.uniform(
            kw, (fan_out, fan_in), jnp.float32, minval=-bound, maxval=bound)
        params[f"b{i}"] = jax.random.uniform(
            kb, (fan_out, 1), jnp.float32, minval=-bound, maxval=bound)
    return params


def reference_forward(x, params):
    h = jnp.maximum(x @ params["w1"].T + params["b1"].T, 0.0)
    h = jnp.maximum(h @ params["w2"].T + params["b2"].T, 0.0)
    h = jnp.maximum(h @ params["w3"].T + params["b3"].T, 0.0)
    h = h @ params["w4"].T + params["b4"].T
    return jax.nn.sigmoid(h)


# TODO(synk): evaluate() in the PyTorch module is host-side dataloader/loss
# accumulation, not part of the forward pass; it is intentionally not a kernel.

if __name__ == "__main__":
    key = jax.random.PRNGKey(0)
    key, kx = jax.random.split(key)

    params = init_params(key)

    # Small case: single batch tile.
    B = 8
    x = jax.random.normal(kx, (B, 6), jnp.float32)
    out = jax.block_until_ready(action_conditioned_ff(x, params))
    ref = reference_forward(x, params)
    assert out.shape == (B, 1), out.shape
    assert jnp.allclose(out, ref, atol=1e-4, rtol=1e-4)

    # Multi-tile case: exercises the batch grid + padding path (3 tiles of 128).
    key, kx2 = jax.random.split(key)
    B2 = 300
    x2 = jax.random.normal(kx2, (B2, 6), jnp.float32)
    out2 = jax.block_until_ready(action_conditioned_ff(x2, params, tb_max=128))
    ref2 = reference_forward(x2, params)
    assert out2.shape == (B2, 1), out2.shape
    assert jnp.allclose(out2, ref2, atol=1e-4, rtol=1e-4)

    print("KERNEL_OK")
</pallas_src>

<mosaic_0001>
module attributes {stable_mosaic.version = 11 : i64} {
  func.func @_mlp_kernel(%arg0: i32, %arg1: memref<6x128xf32, #tpu.memory_space<vmem>>, %arg2: memref<128x6xf32, #tpu.memory_space<vmem>>, %arg3: memref<128x1xf32, #tpu.memory_space<vmem>>, %arg4: memref<64x128xf32, #tpu.memory_space<vmem>>, %arg5: memref<64x1xf32, #tpu.memory_space<vmem>>, %arg6: memref<32x64xf32, #tpu.memory_space<vmem>>, %arg7: memref<32x1xf32, #tpu.memory_space<vmem>>, %arg8: memref<1x32xf32, #tpu.memory_space<vmem>>, %arg9: memref<1x1xf32, #tpu.memory_space<smem>>, %arg10: memref<1x128xf32, #tpu.memory_space<vmem>>) attributes {dimension_semantics = [#tpu.dimension_semantics<parallel>], iteration_bounds = array<i64: 1>, scalar_prefetch = 0 : i64, scratch_operands = 0 : i64, tpu.core_type = #tpu.core_type<tc>, window_params = [{transform_indices = @transform_0, window_bounds = array<i64: 6, 128>}, {pipeline_mode = #tpu.pipeline_mode<synchronous>, transform_indices = @transform_1, window_bounds = array<i64: 128, 6>}, {pipeline_mode = #tpu.pipeline_mode<synchronous>, transform_indices = @transform_2, window_bounds = array<i64: 128, 1>}, {pipeline_mode = #tpu.pipeline_mode<synchronous>, transform_indices = @transform_3, window_bounds = array<i64: 64, 128>}, {pipeline_mode = #tpu.pipeline_mode<synchronous>, transform_indices = @transform_4, window_bounds = array<i64: 64, 1>}, {pipeline_mode = #tpu.pipeline_mode<synchronous>, transform_indices = @transform_5, window_bounds = array<i64: 32, 64>}, {pipeline_mode = #tpu.pipeline_mode<synchronous>, transform_indices = @transform_6, window_bounds = array<i64: 32, 1>}, {pipeline_mode = #tpu.pipeline_mode<synchronous>, transform_indices = @transform_7, window_bounds = array<i64: 1, 32>}, {transform_indices = @transform_8, window_bounds = array<i64: 1, 1>}, {transform_indices = @transform_9, window_bounds = array<i64: 1, 128>}]} {
    %c0 = arith.constant 0 : index
    %c0_0 = arith.constant 0 : index
    %0 = vector.load %arg1[%c0, %c0_0] : memref<6x128xf32, #tpu.memory_space<vmem>>, vector<6x128xf32>
    %c0_1 = arith.constant 0 : index
    %c0_2 = arith.constant 0 : index
    %1 = vector.load %arg2[%c0_1, %c0_2] : memref<128x6xf32, #tpu.memory_space<vmem>>, vector<128x6xf32>
    %cst = arith.constant dense<0.000000e+00> : vector<128x128xf32>
    %2 = tpu.matmul %1, %0, %cst {dimension_numbers = #tpu.dot_dimension_numbers<[1], [0], [0], [1], [0, 0, 1, 1], [], []>} : vector<128x6xf32>, vector<6x128xf32>, vector<128x128xf32> -> vector<128x128xf32>
    %c0_3 = arith.constant 0 : index
    %c0_4 = arith.constant 0 : index
    %3 = vector.load %arg3[%c0_3, %c0_4] : memref<128x1xf32, #tpu.memory_space<vmem>>, vector<128x1xf32>
    %4 = vector.broadcast %3 : vector<128x1xf32> to vector<128x128xf32>
    %5 = arith.addf %2, %4 : vector<128x128xf32>
    %cst_5 = arith.constant 0.000000e+00 : f32
    %6 = vector.broadcast %cst_5 : f32 to vector<128x128xf32>
    %7 = arith.maximumf %5, %6 : vector<128x128xf32>
    %c0_6 = arith.constant 0 : index
    %c0_7 = arith.constant 0 : index
    %8 = vector.load %arg4[%c0_6, %c0_7] : memref<64x128xf32, #tpu.memory_space<vmem>>, vector<64x128xf32>
    %cst_8 = arith.constant dense<0.000000e+00> : vector<64x128xf32>
    %9 = tpu.matmul %8, %7, %cst_8 {dimension_numbers = #tpu.dot_dimension_numbers<[1], [0], [0], [1], [0, 0, 1, 1], [], []>} : vector<64x128xf32>, vector<128x128xf32>, vector<64x128xf32> -> vector<64x128xf32>
    %c0_9 = arith.constant 0 : index
    %c0_10 = arith.constant 0 : index
    %10 = vector.load %arg5[%c0_9, %c0_10] : memref<64x1xf32, #tpu.memory_space<vmem>>, vector<64x1xf32>
    %11 = vector.broadcast %10 : vector<64x1xf32> to vector<64x128xf32>
    %12 = arith.addf %9, %11 : vector<64x128xf32>
    %cst_11 = arith.constant 0.000000e+00 : f32
    %13 = vector.broadcast %cst_11 : f32 to vector<64x128xf32>
    %14 = arith.maximumf %12, %13 : vector<64x128xf32>
    %c0_12 = arith.constant 0 : index
    %c0_13 = arith.constant 0 : index
    %15 = vector.load %arg6[%c0_12, %c0_13] : memref<32x64xf32, #tpu.memory_space<vmem>>, vector<32x64xf32>
    %cst_14 = arith.constant dense<0.000000e+00> : vector<32x128xf32>
    %16 = tpu.matmul %15, %14, %cst_14 {dimension_numbers = #tpu.dot_dimension_numbers<[1], [0], [0], [1], [0, 0, 1, 1], [], []>} : vector<32x64xf32>, vector<64x128xf32>, vector<32x128xf32> -> vector<32x128xf32>
    %c0_15 = arith.constant 0 : index
    %c0_16 = arith.constant 0 : index
    %17 = vector.load %arg7[%c0_15, %c0_16] : memref<32x1xf32, #tpu.memory_space<vmem>>, vector<32x1xf32>
    %18 = vector.broadcast %17 : vector<32x1xf32> to vector<32x128xf32>
    %19 = arith.addf %16, %18 : vector<32x128xf32>
    %cst_17 = arith.constant 0.000000e+00 : f32
    %20 = vector.broadcast %cst_17 : f32 to vector<32x128xf32>
    %21 = arith.maximumf %19, %20 : vector<32x128xf32>
    %c0_18 = arith.constant 0 : index
    %c0_19 = arith.constant 0 : index
    %22 = vector.load %arg8[%c0_18, %c0_19] : memref<1x32xf32, #tpu.memory_space<vmem>>, vector<1x32xf32>
    %cst_20 = arith.constant dense<0.000000e+00> : vector<1x128xf32>
    %23 = tpu.matmul %22, %21, %cst_20 {dimension_numbers = #tpu.dot_dimension_numbers<[1], [0], [0], [1], [0, 0, 1, 1], [], []>} : vector<1x32xf32>, vector<32x128xf32>, vector<1x128xf32> -> vector<1x128xf32>
    %c0_21 = arith.constant 0 : index
    %c0_22 = arith.constant 0 : index
    %24 = memref.load %arg9[%c0_21, %c0_22] : memref<1x1xf32, #tpu.memory_space<smem>>
    %25 = vector.broadcast %24 : f32 to vector<1x128xf32>
    %26 = arith.addf %23, %25 : vector<1x128xf32>
    %27 = arith.negf %26 : vector<1x128xf32>
    %28 = math.exp %27 : vector<1x128xf32>
    %cst_23 = arith.constant 1.000000e+00 : f32
    %29 = vector.broadcast %cst_23 : f32 to vector<1x128xf32>
    %30 = arith.addf %29, %28 : vector<1x128xf32>
    %31 = arith.divf %29, %30 : vector<1x128xf32>
    %c0_24 = arith.constant 0 : index
    %c0_25 = arith.constant 0 : index
    %32 = vector.load %arg10[%c0_24, %c0_25] : memref<1x128xf32, #tpu.memory_space<vmem>>, vector<1x128xf32>
    tpu.vector_store %arg10[%c0_24, %c0_25], %31 {strides = array<i32>} : memref<1x128xf32, #tpu.memory_space<vmem>>, vector<1x128xf32>,
    return
  }
  func.func @transform_0(%arg0: i32) -> (i32, i32) {
    %c0_i32 = arith.constant 0 : i32
    %c0_i32_0 = arith.constant 0 : i32
    return %c0_i32, %arg0 : i32, i32
  }
  func.func @transform_1(%arg0: i32) -> (i32, i32) {
    %c0_i32 = arith.constant 0 : i32
    %c0_i32_0 = arith.constant 0 : i32
    %c0_i32_1 = arith.constant 0 : i32
    return %c0_i32, %c0_i32_0 : i32, i32
  }
  func.func @transform_2(%arg0: i32) -> (i32, i32) {
    %c0_i32 = arith.constant 0 : i32
    %c0_i32_0 = arith.constant 0 : i32
    %c0_i32_1 = arith.constant 0 : i32
    return %c0_i32, %c0_i32_0 : i32, i32
  }
  func.func @transform_3(%arg0: i32) -> (i32, i32) {
    %c0_i32 = arith.constant 0 : i32
    %c0_i32_0 = arith.constant 0 : i32
    %c0_i32_1 = arith.constant 0 : i32
    return %c0_i32, %c0_i32_0 : i32, i32
  }
  func.func @transform_4(%arg0: i32) -> (i32, i32) {
    %c0_i32 = arith.constant 0 : i32
    %c0_i32_0 = arith.constant 0 : i32
    %c0_i32_1 = arith.constant 0 : i32
    return %c0_i32, %c0_i32_0 : i32, i32
  }
  func.func @transform_5(%arg0: i32) -> (i32, i32) {
    %c0_i32 = arith.constant 0 : i32
    %c0_i32_0 = arith.constant 0 : i32
    %c0_i32_1 = arith.constant 0 : i32
    return %c0_i32, %c0_i32_0 : i32, i32
  }
  func.func @transform_6(%arg0: i32) -> (i32, i32) {
    %c0_i32 = arith.constant 0 : i32
    %c0_i32_0 = arith.constant 0 : i32
    %c0_i32_1 = arith.constant 0 : i32
    return %c0_i32, %c0_i32_0 : i32, i32
  }
  func.func @transform_7(%arg0: i32) -> (i32, i32) {
    %c0_i32 = arith.constant 0 : i32
    %c0_i32_0 = arith.constant 0 : i32
    %c0_i32_1 = arith.constant 0 : i32
    return %c0_i32, %c0_i32_0 : i32, i32
  }
  func.func @transform_8(%arg0: i32) -> (i32, i32) {
    %c0_i32 = arith.constant 0 : i32
    %c0_i32_0 = arith.constant 0 : i32
    %c0_i32_1 = arith.constant 0 : i32
    return %c0_i32, %c0_i32_0 : i32, i32
  }
  func.func @transform_9(%arg0: i32) -> (i32, i32) {
    %c0_i32 = arith.constant 0 : i32
    %c0_i32_0 = arith.constant 0 : i32
    return %c0_i32, %arg0 : i32, i32
  }
}

</mosaic_0001>

<llo_original>
// kernel: tpu_custom_call.1
$region0: #{tpu_custom_call.1}
  #allocation0 [shape = 'u32[]', space=smem, size = 0x4, offset = 0x4, fixed_abs, tag = 'smem constant byte address 0x4 - core index']
  #allocation1 [shape = 'u32[144,128]{1,0:T(1,128)}', space=vmem, size = 0x12000, scoped, tag = 'internal scratch']
  #allocation2 [shape = 'f32[1,1]{1,0:T(1,128)S(6)}', space=smem, size = 0x200, scoped, tag = 'scoped memory for tpu_custom_call.1']
  %s0 = inlined_call_operand.vmem [shape: f32[6,128], index: 0, kind: input, shape index: {}]
  %s1 = inlined_call_operand.vmem [shape: f32[128,6], index: 1, kind: input, shape index: {}]
  %s2 = inlined_call_operand.vmem [shape: f32[128,1], index: 2, kind: input, shape index: {}]
  %s3 = inlined_call_operand.vmem [shape: f32[64,128], index: 3, kind: input, shape index: {}]
  %s4 = inlined_call_operand.vmem [shape: f32[64,1], index: 4, kind: input, shape index: {}]
  %s5 = inlined_call_operand.vmem [shape: f32[32,64], index: 5, kind: input, shape index: {}]
  %s6 = inlined_call_operand.vmem [shape: f32[32,1], index: 6, kind: input, shape index: {}]
  %s7 = inlined_call_operand.vmem [shape: f32[1,32], index: 7, kind: input, shape index: {}]
  %s8 = inlined_call_operand.<no memory space> [shape: f32[1,1], index: 8, kind: input, shape index: {}]
  %s9 = inlined_call_operand.hbm [shape: f32[1,128], index: 9, kind: output, shape index: {}]
  %s10 = sld [smem:[#allocation0]]
  $region46: #{tpu_custom_call.1} parent=0
    _
  %s12 = ssub.s32 1, %s10
  %s13 = scalar_select 0, %s12, %s10
  %14 = sst [smem:[#allocation2]] %s8
  $region1: #{tpu_custom_call.1} parent=0
    #allocation3 [shape = 'u8[512]{0}', space=vmem, size = 0x400, scoped, tag = 'output window, operand 0, single buffered']
    #allocation4 [shape = 's32[1]{0}', space=sflag, size = 0x4, scoped, tag = 'scoped memory for tpu_custom_call.1']
    %15 = vsyncpa [#allocation4], 0
    // Predicated region
    $region2: #{tpu_custom_call.1} parent=1 // pred_check
      _
    $region3: #{tpu_custom_call.1} parent=1 // pred_check_branch
      %17 = sbr.rel (0) target = $region5
    $region4: #{tpu_custom_call.1} parent=1 // pred_region
      _
    $region5: #{tpu_custom_call.1} parent=1 // pred_fallthru
      _
    // Predicated region
    $region6: #{tpu_custom_call.1} parent=1 // pred_check
      _
    $region7: #{tpu_custom_call.1} parent=1 // pred_check_branch
      %19 = sbr.rel (0) target = $region9
    $region8: #{tpu_custom_call.1} parent=1 // pred_region
      _
    $region9: #{tpu_custom_call.1} parent=1 // pred_fallthru
      _
    // Predicated region
    $region10: #{tpu_custom_call.1} parent=1 // pred_check
      _
    $region11: #{tpu_custom_call.1} parent=1 // pred_check_branch
      %21 = sbr.rel (0) target = $region13
    $region12: #{tpu_custom_call.1} parent=1 // pred_region
      _
    $region13: #{tpu_custom_call.1} parent=1 // pred_fallthru
      _
    // Predicated region
    $region14: #{tpu_custom_call.1} parent=1 // pred_check
      _
    $region15: #{tpu_custom_call.1} parent=1 // pred_check_branch
      %23 = sbr.rel (0) target = $region17
    $region16: #{tpu_custom_call.1} parent=1 // pred_region
      _
    $region17: #{tpu_custom_call.1} parent=1 // pred_fallthru
      _
    // Predicated region
    $region18: #{tpu_custom_call.1} parent=1 // pred_check
      _
    $region19: #{tpu_custom_call.1} parent=1 // pred_check_branch
      %25 = sbr.rel (0) target = $region21
    $region20: #{tpu_custom_call.1} parent=1 // pred_region
      _
    $region21: #{tpu_custom_call.1} parent=1 // pred_fallthru
      _
    // Predicated region
    $region22: #{tpu_custom_call.1} parent=1 // pred_check
      _
    $region23: #{tpu_custom_call.1} parent=1 // pred_check_branch
      %27 = sbr.rel (0) target = $region25
    $region24: #{tpu_custom_call.1} parent=1 // pred_region
      _
    $region25: #{tpu_custom_call.1} parent=1 // pred_fallthru
      _
    // Predicated region
    $region26: #{tpu_custom_call.1} parent=1 // pred_check
      _
    $region27: #{tpu_custom_call.1} parent=1 // pred_check_branch
      %29 = sbr.rel (0) target = $region29
    $region28: #{tpu_custom_call.1} parent=1 // pred_region
      _
    $region29: #{tpu_custom_call.1} parent=1 // pred_fallthru
      _
    // Predicated region
    $region30: #{tpu_custom_call.1} parent=1 // pred_check
      _
    $region31: #{tpu_custom_call.1} parent=1 // pred_check_branch
      %31 = sbr.rel (0) target = $region33
    $region32: #{tpu_custom_call.1} parent=1 // pred_region
      _
    $region33: #{tpu_custom_call.1} parent=1 // pred_fallthru
      _
    // Predicated region
    $region34: #{tpu_custom_call.1} parent=1 // pred_check
      _
    $region35: #{tpu_custom_call.1} parent=1 // pred_check_branch
      %33 = sbr.rel (0) target = $region37
    $region36: #{tpu_custom_call.1} parent=1 // pred_region
      _
    $region37: #{tpu_custom_call.1} parent=1 // pred_fallthru
      _
    %v34 = vld [vmem:[%s0] sm:$0x3f]
    %v35 = vld [vmem:[%s1] sm:$0xff]
    %v36 = vld [vmem:[%s1 + $0x8] sm:$0xff]
    %v37 = vld [vmem:[%s1 + $0x10] sm:$0xff]
    %v38 = vld [vmem:[%s1 + $0x18] sm:$0xff]
    %v39 = vld [vmem:[%s1 + $0x20] sm:$0xff]
    %v40 = vld [vmem:[%s1 + $0x28] sm:$0xff]
    %v41 = vld [vmem:[%s1 + $0x30] sm:$0xff]
    %v42 = vld [vmem:[%s1 + $0x38] sm:$0xff]
    %v43 = vld [vmem:[%s1 + $0x40] sm:$0xff]
    %v44 = vld [vmem:[%s1 + $0x48] sm:$0xff]
    %v45 = vld [vmem:[%s1 + $0x50] sm:$0xff]
    %v46 = vld [vmem:[%s1 + $0x58] sm:$0xff]
    %v47 = vld [vmem:[%s1 + $0x60] sm:$0xff]
    %v48 = vld [vmem:[%s1 + $0x68] sm:$0xff]
    %v49 = vld [vmem:[%s1 + $0x70] sm:$0xff]
    %v50 = vld [vmem:[%s1 + $0x78] sm:$0xff]
    %v51 = vld [vmem:[%s2] sm:$0xff]
    %v52 = vld [vmem:[%s2 + $0x8] sm:$0xff]
    %v53 = vld [vmem:[%s2 + $0x10] sm:$0xff]
    %v54 = vld [vmem:[%s2 + $0x18] sm:$0xff]
    %v55 = vld [vmem:[%s2 + $0x20] sm:$0xff]
    %v56 = vld [vmem:[%s2 + $0x28] sm:$0xff]
    %v57 = vld [vmem:[%s2 + $0x30] sm:$0xff]
    %v58 = vld [vmem:[%s2 + $0x38] sm:$0xff]
    %v59 = vld [vmem:[%s2 + $0x40] sm:$0xff]
    %v60 = vld [vmem:[%s2 + $0x48] sm:$0xff]
    %v61 = vld [vmem:[%s2 + $0x50] sm:$0xff]
    %v62 = vld [vmem:[%s2 + $0x58] sm:$0xff]
    %v63 = vld [vmem:[%s2 + $0x60] sm:$0xff]
    %v64 = vld [vmem:[%s2 + $0x68] sm:$0xff]
    %v65 = vld [vmem:[%s2 + $0x70] sm:$0xff]
    %v66 = vld [vmem:[%s2 + $0x78] sm:$0xff]
    %68 = vset.pattern.permute.xlu0 0
    %69 = vperm.xlu0 %68, %v51
    %v70 = vpop.permute.xlu0 %69
    %73 = vset.pattern.permute.xlu0 0
    %74 = vperm.xlu0 %73, %v52
    %v75 = vpop.permute.xlu0 %74
    %78 = vset.pattern.permute.xlu0 0
    %79 = vperm.xlu0 %78, %v53
    %v80 = vpop.permute.xlu0 %79
    %83 = vset.pattern.permute.xlu0 0
    %84 = vperm.xlu0 %83, %v54
    %v85 = vpop.permute.xlu0 %84
    %88 = vset.pattern.permute.xlu0 0
    %89 = vperm.xlu0 %88, %v55
    %v90 = vpop.permute.xlu0 %89
    %93 = vset.pattern.permute.xlu0 0
    %94 = vperm.xlu0 %93, %v56
    %v95 = vpop.permute.xlu0 %94
    %98 = vset.pattern.permute.xlu0 0
    %99 = vperm.xlu0 %98, %v57
    %v100 = vpop.permute.xlu0 %99
    %103 = vset.pattern.permute.xlu0 0
    %104 = vperm.xlu0 %103, %v58
    %v105 = vpop.permute.xlu0 %104
    %108 = vset.pattern.permute.xlu0 0
    %109 = vperm.xlu0 %108, %v59
    %v110 = vpop.permute.xlu0 %109
    %113 = vset.pattern.permute.xlu0 0
    %114 = vperm.xlu0 %113, %v60
    %v115 = vpop.permute.xlu0 %114
    %118 = vset.pattern.permute.xlu0 0
    %119 = vperm.xlu0 %118, %v61
    %v120 = vpop.permute.xlu0 %119
    %123 = vset.pattern.permute.xlu0 0
    %124 = vperm.xlu0 %123, %v62
    %v125 = vpop.permute.xlu0 %124
    %128 = vset.pattern.permute.xlu0 0
    %129 = vperm.xlu0 %128, %v63
    %v130 = vpop.permute.xlu0 %129
    %133 = vset.pattern.permute.xlu0 0
    %134 = vperm.xlu0 %133, %v64
    %v135 = vpop.permute.xlu0 %134
    %138 = vset.pattern.permute.xlu0 0
    %139 = vperm.xlu0 %138, %v65
    %v140 = vpop.permute.xlu0 %139
    %143 = vset.pattern.permute.xlu0 0
    %144 = vperm.xlu0 %143, %v66
    %v145 = vpop.permute.xlu0 %144
    %vm147 = vcmask 48128
    %v149 = vsel %vm147, %v35, 0
    %v152 = vsel %vm147, %v36, 0
    %v155 = vsel %vm147, %v37, 0
    %v158 = vsel %vm147, %v38, 0
    %v161 = vsel %vm147, %v39, 0
    %v164 = vsel %vm147, %v40, 0
    %v167 = vsel %vm147, %v41, 0
    %v170 = vsel %vm147, %v42, 0
    %v173 = vsel %vm147, %v43, 0
    %v176 = vsel %vm147, %v44, 0
    %v179 = vsel %vm147, %v45, 0
    %v182 = vsel %vm147, %v46, 0
    %v185 = vsel %vm147, %v47, 0
    %v188 = vsel %vm147, %v48, 0
    %v191 = vsel %vm147, %v49, 0
    %v194 = vsel %vm147, %v50, 0
    %vm196 = vcmask 1045504
    %v198 = vsel %vm196, %v34, 0
    %200 = vmatprep.subr.mxu0 0.0
    %201 = vmatpush1.msra.mxu0 %v198
    %202 = vmatprep.subr.mxu0 0.0
    %203 = vmatpush1.msra.mxu0 0.0
    %204 = vmatprep.subr.mxu0 0.0
    %205 = vmatpush1.msra.mxu0 0.0
    %206 = vmatprep.subr.mxu0 0.0
    %207 = vmatpush1.msra.mxu0 0.0
    %208 = vmatprep.subr.mxu0 0.0
    %209 = vmatpush1.msra.mxu0 0.0
    %210 = vmatprep.subr.mxu0 0.0
    %211 = vmatpush1.msra.mxu0 0.0
    %212 = vmatprep.subr.mxu0 0.0
    %213 = vmatpush1.msra.mxu0 0.0
    %214 = vmatprep.subr.mxu0 0.0
    %215 = vmatpush1.msra.mxu0 0.0
    %216 = vmatprep.subr.mxu0 0.0
    %217 = vmatpush1.msra.mxu0 0.0
    %218 = vmatprep.subr.mxu0 0.0
    %219 = vmatpush1.msra.mxu0 0.0
    %220 = vmatprep.subr.mxu0 0.0
    %221 = vmatpush1.msra.mxu0 0.0
    %222 = vmatprep.subr.mxu0 0.0
    %223 = vmatpush1.msra.mxu0 0.0
    %224 = vmatprep.subr.mxu0 0.0
    %225 = vmatpush1.msra.mxu0 0.0
    %226 = vmatprep.subr.mxu0 0.0
    %227 = vmatpush1.msra.mxu0 0.0
    %228 = vmatprep.subr.mxu0 0.0
    %229 = vmatpush1.msra.mxu0 0.0
    %230 = vmatprep.subr.mxu0 0.0
    %231 = vmatpush1.msra.mxu0 0.0
    %232 = vmatprep.subr.mxu0 0.0
    %233 = vmatpush1.msra.mxu0 0.0
    %234 = vmatprep.subr.mxu0 0.0
    %235 = vmatpush1.msra.mxu0 0.0
    %236 = vmatprep.subr.mxu0 0.0
    %237 = vmatpush1.msra.mxu0 0.0
    %238 = vmatprep.subr.mxu0 0.0
    %239 = vmatpush1.msra.mxu0 0.0
    %240 = vmatprep.subr.mxu0 0.0
    %241 = vmatpush1.msra.mxu0 0.0
    %242 = vmatprep.subr.mxu0 0.0
    %243 = vmatpush1.msra.mxu0 0.0
    %244 = vmatprep.subr.mxu0 0.0
    %245 = vmatpush1.msra.mxu0 0.0
    %246 = vmatprep.subr.mxu0 0.0
    %247 = vmatpush1.msra.mxu0 0.0
    %248 = vmatprep.subr.mxu0 0.0
    %249 = vmatpush1.msra.mxu0 0.0
    %250 = vmatprep.subr.mxu0 0.0
    %251 = vmatpush1.msra.mxu0 0.0
    %252 = vmatprep.subr.mxu0 0.0
    %253 = vmatpush1.msra.mxu0 0.0
    %254 = vmatprep.subr.mxu0 0.0
    %255 = vmatpush1.msra.mxu0 0.0
    %256 = vmatprep.subr.mxu0 0.0
    %257 = vmatpush1.msra.mxu0 0.0
    %258 = vmatprep.subr.mxu0 0.0
    %259 = vmatpush1.msra.mxu0 0.0
    %260 = vmatprep.subr.mxu0 0.0
    %261 = vmatpush1.msra.mxu0 0.0
    %262 = vmatprep.subr.mxu0 0.0
    %263 = vmatpush1.msra.mxu0 0.0
    %264 = vmatprep.mubr.f32.mxu0 0.0
    %265 = vmatmul.mubr.f32.gmra.mrb[0].mxu0 %v149
    %v266 = vpop.f32.mrb[0].mxu0
    %v267 = vadd.f32 %v70, %v266
    %v268 = vpop.f32.mrb[0].mxu0
    %269 = vmatprep.mubr.f32.mxu0 0.0
    %270 = vmatmul.mubr.f32.gmra.mrb[0].mxu0 %v152
    %v271 = vpop.f32.mrb[0].mxu0
    %v272 = vadd.f32 %v75, %v271
    %v273 = vpop.f32.mrb[0].mxu0
    %274 = vmatprep.mubr.f32.mxu0 0.0
    %275 = vmatmul.mubr.f32.gmra.mrb[0].mxu0 %v155
    %v276 = vpop.f32.mrb[0].mxu0
    %v277 = vadd.f32 %v80, %v276
    %v278 = vpop.f32.mrb[0].mxu0
    %279 = vmatprep.mubr.f32.mxu0 0.0
    %280 = vmatmul.mubr.f32.gmra.mrb[0].mxu0 %v158
    %v281 = vpop.f32.mrb[0].mxu0
    %v282 = vadd.f32 %v85, %v281
    %v283 = vpop.f32.mrb[0].mxu0
    %284 = vmatprep.mubr.f32.mxu0 0.0
    %285 = vmatmul.mubr.f32.gmra.mrb[0].mxu0 %v161
    %v286 = vpop.f32.mrb[0].mxu0
    %v287 = vadd.f32 %v90, %v286
    %v288 = vpop.f32.mrb[0].mxu0
    %289 = vmatprep.mubr.f32.mxu0 0.0
    %290 = vmatmul.mubr.f32.gmra.mrb[0].mxu0 %v164
    %v291 = vpop.f32.mrb[0].mxu0
    %v292 = vadd.f32 %v95, %v291
    %v293 = vpop.f32.mrb[0].mxu0
    %294 = vmatprep.mubr.f32.mxu0 0.0
    %295 = vmatmul.mubr.f32.gmra.mrb[0].mxu0 %v167
    %v296 = vpop.f32.mrb[0].mxu0
    %v297 = vadd.f32 %v100, %v296
    %v298 = vpop.f32.mrb[0].mxu0
    %299 = vmatprep.mubr.f32.mxu0 0.0
    %300 = vmatmul.mubr.f32.gmra.mrb[0].mxu0 %v170
    %v301 = vpop.f32.mrb[0].mxu0
    %v302 = vadd.f32 %v105, %v301
    %v303 = vpop.f32.mrb[0].mxu0
    %304 = vmatprep.mubr.f32.mxu0 0.0
    %305 = vmatmul.mubr.f32.gmra.mrb[0].mxu0 %v173
    %v306 = vpop.f32.mrb[0].mxu0
    %v307 = vadd.f32 %v110, %v306
    %v308 = vpop.f32.mrb[0].mxu0
    %309 = vmatprep.mubr.f32.mxu0 0.0
    %310 = vmatmul.mubr.f32.gmra.mrb[0].mxu0 %v176
    %v311 = vpop.f32.mrb[0].mxu0
    %v312 = vadd.f32 %v115, %v311
    %v313 = vpop.f32.mrb[0].mxu0
    %314 = vmatprep.mubr.f32.mxu0 0.0
    %315 = vmatmul.mubr.f32.gmra.mrb[0].mxu0 %v179
    %v316 = vpop.f32.mrb[0].mxu0
    %v317 = vadd.f32 %v120, %v316
    %v318 = vpop.f32.mrb[0].mxu0
    %319 = vmatprep.mubr.f32.mxu0 0.0
    %320 = vmatmul.mubr.f32.gmra.mrb[0].mxu0 %v182
    %v321 = vpop.f32.mrb[0].mxu0
    %v322 = vadd.f32 %v125, %v321
    %v323 = vpop.f32.mrb[0].mxu0
    %324 = vmatprep.mubr.f32.mxu0 0.0
    %325 = vmatmul.mubr.f32.gmra.mrb[0].mxu0 %v185
    %v326 = vpop.f32.mrb[0].mxu0
    %v327 = vadd.f32 %v130, %v326
    %v328 = vpop.f32.mrb[0].mxu0
    %329 = vmatprep.mubr.f32.mxu0 0.0
    %330 = vmatmul.mubr.f32.gmra.mrb[0].mxu0 %v188
    %v331 = vpop.f32.mrb[0].mxu0
    %v332 = vadd.f32 %v135, %v331
    %v333 = vpop.f32.mrb[0].mxu0
    %334 = vmatprep.mubr.f32.mxu0 0.0
    %335 = vmatmul.mubr.f32.gmra.mrb[0].mxu0 %v191
    %v336 = vpop.f32.mrb[0].mxu0
    %v337 = vadd.f32 %v140, %v336
    %v338 = vpop.f32.mrb[0].mxu0
    %339 = vmatprep.mubr.f32.mxu0 0.0
    %340 = vmatmul.mubr.f32.gmra.mrb[0].mxu0 %v194
    %v341 = vpop.f32.mrb[0].mxu0
    %v342 = vadd.f32 %v145, %v341
    %v343 = vpop.f32.mrb[0].mxu0
    %344 = vdwg.mxu0
    %v345 = vmax.f32 %v267, 0.0
    %v346 = vmax.f32 %v272, 0.0
    %v347 = vmax.f32 %v277, 0.0
    %v348 = vmax.f32 %v282, 0.0
    %v349 = vmax.f32 %v287, 0.0
    %v350 = vmax.f32 %v292, 0.0
    %v351 = vmax.f32 %v297, 0.0
    %v352 = vmax.f32 %v302, 0.0
    %v353 = vmax.f32 %v307, 0.0
    %v354 = vmax.f32 %v312, 0.0
    %v355 = vmax.f32 %v317, 0.0
    %v356 = vmax.f32 %v322, 0.0
    %v357 = vmax.f32 %v327, 0.0
    %v358 = vmax.f32 %v332, 0.0
    %v359 = vmax.f32 %v337, 0.0
    %v360 = vmax.f32 %v342, 0.0
    %v361 = vld [vmem:[%s3] sm:$0xff]
    %v362 = vld [vmem:[%s3 + $0x8] sm:$0xff]
    %v363 = vld [vmem:[%s3 + $0x10] sm:$0xff]
    %v364 = vld [vmem:[%s3 + $0x18] sm:$0xff]
    %v365 = vld [vmem:[%s3 + $0x20] sm:$0xff]
    %v366 = vld [vmem:[%s3 + $0x28] sm:$0xff]
    %v367 = vld [vmem:[%s3 + $0x30] sm:$0xff]
    %v368 = vld [vmem:[%s3 + $0x38] sm:$0xff]
    %v369 = vld [vmem:[%s4] sm:$0xff]
    %v370 = vld [vmem:[%s4 + $0x8] sm:$0xff]
    %v371 = vld [vmem:[%s4 + $0x10] sm:$0xff]
    %v372 = vld [vmem:[%s4 + $0x18] sm:$0xff]
    %v373 = vld [vmem:[%s4 + $0x20] sm:$0xff]
    %v374 = vld [vmem:[%s4 + $0x28] sm:$0xff]
    %v375 = vld [vmem:[%s4 + $0x30] sm:$0xff]
    %v376 = vld [vmem:[%s4 + $0x38] sm:$0xff]
    %378 = vset.pattern.permute.xlu0 0
    %379 = vperm.xlu0 %378, %v369
    %v380 = vpop.permute.xlu0 %379
    %383 = vset.pattern.permute.xlu0 0
    %384 = vperm.xlu0 %383, %v370
    %v385 = vpop.permute.xlu0 %384
    %388 = vset.pattern.permute.xlu0 0
    %389 = vperm.xlu0 %388, %v371
    %v390 = vpop.permute.xlu0 %389
    %393 = vset.pattern.permute.xlu0 0
    %394 = vperm.xlu0 %393, %v372
    %v395 = vpop.permute.xlu0 %394
    %398 = vset.pattern.permute.xlu0 0
    %399 = vperm.xlu0 %398, %v373
    %v400 = vpop.permute.xlu0 %399
    %403 = vset.pattern.permute.xlu0 0
    %404 = vperm.xlu0 %403, %v374
    %v405 = vpop.permute.xlu0 %404
    %408 = vset.pattern.permute.xlu0 0
    %409 = vperm.xlu0 %408, %v375
    %v410 = vpop.permute.xlu0 %409
    %413 = vset.pattern.permute.xlu0 0
    %414 = vperm.xlu0 %413, %v376
    %v415 = vpop.permute.xlu0 %414
    %417 = vmatprep.subr.mxu0 0.0
    %418 = vmatpush1.msra.mxu0 %v345
    %419 = vmatprep.subr.mxu0 0.0
    %420 = vmatpush1.msra.mxu0 %v346
    %421 = vmatprep.subr.mxu0 0.0
    %422 = vmatpush1.msra.mxu0 %v347
    %423 = vmatprep.subr.mxu0 0.0
    %424 = vmatpush1.msra.mxu0 %v348
    %425 = vmatprep.subr.mxu0 0.0
    %426 = vmatpush1.msra.mxu0 %v349
    %427 = vmatprep.subr.mxu0 0.0
    %428 = vmatpush1.msra.mxu0 %v350
    %429 = vmatprep.subr.mxu0 0.0
    %430 = vmatpush1.msra.mxu0 %v351
    %431 = vmatprep.subr.mxu0 0.0
    %432 = vmatpush1.msra.mxu0 %v352
    %433 = vmatprep.subr.mxu0 0.0
    %434 = vmatpush1.msra.mxu0 %v353
    %435 = vmatprep.subr.mxu0 0.0
    %436 = vmatpush1.msra.mxu0 %v354
    %437 = vmatprep.subr.mxu0 0.0
    %438 = vmatpush1.msra.mxu0 %v355
    %439 = vmatprep.subr.mxu0 0.0
    %440 = vmatpush1.msra.mxu0 %v356
    %441 = vmatprep.subr.mxu0 0.0
    %442 = vmatpush1.msra.mxu0 %v357
    %443 = vmatprep.subr.mxu0 0.0
    %444 = vmatpush1.msra.mxu0 %v358
    %445 = vmatprep.subr.mxu0 0.0
    %446 = vmatpush1.msra.mxu0 %v359
    %447 = vmatprep.subr.mxu0 0.0
    %448 = vmatpush1.msra.mxu0 %v360
    %449 = vmatprep.subr.mxu0 0.0
    %450 = vmatpush1.msra.mxu0 0.0
    %451 = vmatprep.subr.mxu0 0.0
    %452 = vmatpush1.msra.mxu0 0.0
    %453 = vmatprep.subr.mxu0 0.0
    %454 = vmatpush1.msra.mxu0 0.0
    %455 = vmatprep.subr.mxu0 0.0
    %456 = vmatpush1.msra.mxu0 0.0
    %457 = vmatprep.subr.mxu0 0.0
    %458 = vmatpush1.msra.mxu0 0.0
    %459 = vmatprep.subr.mxu0 0.0
    %460 = vmatpush1.msra.mxu0 0.0
    %461 = vmatprep.subr.mxu0 0.0
    %462 = vmatpush1.msra.mxu0 0.0
    %463 = vmatprep.subr.mxu0 0.0
    %464 = vmatpush1.msra.mxu0 0.0
    %465 = vmatprep.subr.mxu0 0.0
    %466 = vmatpush1.msra.mxu0 0.0
    %467 = vmatprep.subr.mxu0 0.0
    %468 = vmatpush1.msra.mxu0 0.0
    %469 = vmatprep.subr.mxu0 0.0
    %470 = vmatpush1.msra.mxu0 0.0
    %471 = vmatprep.subr.mxu0 0.0
    %472 = vmatpush1.msra.mxu0 0.0
    %473 = vmatprep.subr.mxu0 0.0
    %474 = vmatpush1.msra.mxu0 0.0
    %475 = vmatprep.subr.mxu0 0.0
    %476 = vmatpush1.msra.mxu0 0.0
    %477 = vmatprep.subr.mxu0 0.0
    %478 = vmatpush1.msra.mxu0 0.0
    %479 = vmatprep.subr.mxu0 0.0
    %480 = vmatpush1.msra.mxu0 0.0
    %481 = vmatprep.mubr.f32.mxu0 0.0
    %482 = vmatmul.mubr.f32.gmra.mrb[0].mxu0 %v361
    %v483 = vpop.f32.mrb[0].mxu0
    %v484 = vadd.f32 %v380, %v483
    %v485 = vpop.f32.mrb[0].mxu0
    %486 = vmatprep.mubr.f32.mxu0 0.0
    %487 = vmatmul.mubr.f32.gmra.mrb[0].mxu0 %v362
    %v488 = vpop.f32.mrb[0].mxu0
    %v489 = vadd.f32 %v385, %v488
    %v490 = vpop.f32.mrb[0].mxu0
    %491 = vmatprep.mubr.f32.mxu0 0.0
    %492 = vmatmul.mubr.f32.gmra.mrb[0].mxu0 %v363
    %v493 = vpop.f32.mrb[0].mxu0
    %v494 = vadd.f32 %v390, %v493
    %v495 = vpop.f32.mrb[0].mxu0
    %496 = vmatprep.mubr.f32.mxu0 0.0
    %497 = vmatmul.mubr.f32.gmra.mrb[0].mxu0 %v364
    %v498 = vpop.f32.mrb[0].mxu0
    %v499 = vadd.f32 %v395, %v498
    %v500 = vpop.f32.mrb[0].mxu0
    %501 = vmatprep.mubr.f32.mxu0 0.0
    %502 = vmatmul.mubr.f32.gmra.mrb[0].mxu0 %v365
    %v503 = vpop.f32.mrb[0].mxu0
    %v504 = vadd.f32 %v400, %v503
    %v505 = vpop.f32.mrb[0].mxu0
    %506 = vmatprep.mubr.f32.mxu0 0.0
    %507 = vmatmul.mubr.f32.gmra.mrb[0].mxu0 %v366
    %v508 = vpop.f32.mrb[0].mxu0
    %v509 = vadd.f32 %v405, %v508
    %v510 = vpop.f32.mrb[0].mxu0
    %511 = vmatprep.mubr.f32.mxu0 0.0
    %512 = vmatmul.mubr.f32.gmra.mrb[0].mxu0 %v367
    %v513 = vpop.f32.mrb[0].mxu0
    %v514 = vadd.f32 %v410, %v513
    %v515 = vpop.f32.mrb[0].mxu0
    %516 = vmatprep.mubr.f32.mxu0 0.0
    %517 = vmatmul.mubr.f32.gmra.mrb[0].mxu0 %v368
    %v518 = vpop.f32.mrb[0].mxu0
    %v519 = vadd.f32 %v415, %v518
    %v520 = vpop.f32.mrb[0].mxu0
    %521 = vdwg.mxu0
    %v522 = vmax.f32 %v484, 0.0
    %v523 = vmax.f32 %v489, 0.0
    %v524 = vmax.f32 %v494, 0.0
    %v525 = vmax.f32 %v499, 0.0
    %v526 = vmax.f32 %v504, 0.0
    %v527 = vmax.f32 %v509, 0.0
    %v528 = vmax.f32 %v514, 0.0
    %v529 = vmax.f32 %v519, 0.0
    %v530 = vld [vmem:[%s5] sm:$0xff]
    %v531 = vld [vmem:[%s5 + $0x8] sm:$0xff]
    %v532 = vld [vmem:[%s5 + $0x10] sm:$0xff]
    %v533 = vld [vmem:[%s5 + $0x18] sm:$0xff]
    %v534 = vld [vmem:[%s6] sm:$0xff]
    %v535 = vld [vmem:[%s6 + $0x8] sm:$0xff]
    %v536 = vld [vmem:[%s6 + $0x10] sm:$0xff]
    %v537 = vld [vmem:[%s6 + $0x18] sm:$0xff]
    %539 = vset.pattern.permute.xlu0 0
    %540 = vperm.xlu0 %539, %v534
    %v541 = vpop.permute.xlu0 %540
    %544 = vset.pattern.permute.xlu0 0
    %545 = vperm.xlu0 %544, %v535
    %v546 = vpop.permute.xlu0 %545
    %549 = vset.pattern.permute.xlu0 0
    %550 = vperm.xlu0 %549, %v536
    %v551 = vpop.permute.xlu0 %550
    %554 = vset.pattern.permute.xlu0 0
    %555 = vperm.xlu0 %554, %v537
    %v556 = vpop.permute.xlu0 %555
    %vm558 = vcmask 523264
    %v560 = vsel %vm558, %v530, 0
    %v563 = vsel %vm558, %v531, 0
    %v566 = vsel %vm558, %v532, 0
    %v569 = vsel %vm558, %v533, 0
    %571 = vmatprep.subr.mxu0 0.0
    %572 = vmatpush1.msra.mxu0 %v522
    %573 = vmatprep.subr.mxu0 0.0
    %574 = vmatpush1.msra.mxu0 %v523
    %575 = vmatprep.subr.mxu0 0.0
    %576 = vmatpush1.msra.mxu0 %v524
    %577 = vmatprep.subr.mxu0 0.0
    %578 = vmatpush1.msra.mxu0 %v525
    %579 = vmatprep.subr.mxu0 0.0
    %580 = vmatpush1.msra.mxu0 %v526
    %581 = vmatprep.subr.mxu0 0.0
    %582 = vmatpush1.msra.mxu0 %v527
    %583 = vmatprep.subr.mxu0 0.0
    %584 = vmatpush1.msra.mxu0 %v528
    %585 = vmatprep.subr.mxu0 0.0
    %586 = vmatpush1.msra.mxu0 %v529
    %587 = vmatprep.subr.mxu0 0.0
    %588 = vmatpush1.msra.mxu0 0.0
    %589 = vmatprep.subr.mxu0 0.0
    %590 = vmatpush1.msra.mxu0 0.0
    %591 = vmatprep.subr.mxu0 0.0
    %592 = vmatpush1.msra.mxu0 0.0
    %593 = vmatprep.subr.mxu0 0.0
    %594 = vmatpush1.msra.mxu0 0.0
    %595 = vmatprep.subr.mxu0 0.0
    %596 = vmatpush1.msra.mxu0 0.0
    %597 = vmatprep.subr.mxu0 0.0
    %598 = vmatpush1.msra.mxu0 0.0
    %599 = vmatprep.subr.mxu0 0.0
    %600 = vmatpush1.msra.mxu0 0.0
    %601 = vmatprep.subr.mxu0 0.0
    %602 = vmatpush1.msra.mxu0 0.0
    %603 = vmatprep.subr.mxu0 0.0
    %604 = vmatpush1.msra.mxu0 0.0
    %605 = vmatprep.subr.mxu0 0.0
    %606 = vmatpush1.msra.mxu0 0.0
    %607 = vmatprep.subr.mxu0 0.0
    %608 = vmatpush1.msra.mxu0 0.0
    %609 = vmatprep.subr.mxu0 0.0
    %610 = vmatpush1.msra.mxu0 0.0
    %611 = vmatprep.subr.mxu0 0.0
    %612 = vmatpush1.msra.mxu0 0.0
    %613 = vmatprep.subr.mxu0 0.0
    %614 = vmatpush1.msra.mxu0 0.0
    %615 = vmatprep.subr.mxu0 0.0
    %616 = vmatpush1.msra.mxu0 0.0
    %617 = vmatprep.subr.mxu0 0.0
    %618 = vmatpush1.msra.mxu0 0.0
    %619 = vmatprep.subr.mxu0 0.0
    %620 = vmatpush1.msra.mxu0 0.0
    %621 = vmatprep.subr.mxu0 0.0
    %622 = vmatpush1.msra.mxu0 0.0
    %623 = vmatprep.subr.mxu0 0.0
    %624 = vmatpush1.msra.mxu0 0.0
    %625 = vmatprep.subr.mxu0 0.0
    %626 = vmatpush1.msra.mxu0 0.0
    %627 = vmatprep.subr.mxu0 0.0
    %628 = vmatpush1.msra.mxu0 0.0
    %629 = vmatprep.subr.mxu0 0.0
    %630 = vmatpush1.msra.mxu0 0.0
    %631 = vmatprep.subr.mxu0 0.0
    %632 = vmatpush1.msra.mxu0 0.0
    %633 = vmatprep.subr.mxu0 0.0
    %634 = vmatpush1.msra.mxu0 0.0
    %635 = vmatprep.mubr.f32.mxu0 0.0
    %636 = vmatmul.mubr.f32.gmra.mrb[0].mxu0 %v560
    %v637 = vpop.f32.mrb[0].mxu0
    %v638 = vadd.f32 %v541, %v637
    %v639 = vpop.f32.mrb[0].mxu0
    %640 = vmatprep.mubr.f32.mxu0 0.0
    %641 = vmatmul.mubr.f32.gmra.mrb[0].mxu0 %v563
    %v642 = vpop.f32.mrb[0].mxu0
    %v643 = vadd.f32 %v546, %v642
    %v644 = vpop.f32.mrb[0].mxu0
    %645 = vmatprep.mubr.f32.mxu0 0.0
    %646 = vmatmul.mubr.f32.gmra.mrb[0].mxu0 %v566
    %v647 = vpop.f32.mrb[0].mxu0
    %v648 = vadd.f32 %v551, %v647
    %v649 = vpop.f32.mrb[0].mxu0
    %650 = vmatprep.mubr.f32.mxu0 0.0
    %651 = vmatmul.mubr.f32.gmra.mrb[0].mxu0 %v569
    %v652 = vpop.f32.mrb[0].mxu0
    %v653 = vadd.f32 %v556, %v652
    %v654 = vpop.f32.mrb[0].mxu0
    %655 = vdwg.mxu0
    %v656 = vmax.f32 %v638, 0.0
    %v657 = vmax.f32 %v643, 0.0
    %v658 = vmax.f32 %v648, 0.0
    %v659 = vmax.f32 %v653, 0.0
    %v660 = vld [vmem:[%s7] sm:$0x1]
    %s661 = sld [smem:[#allocation2]]
    %v662 = vstv %s661
    %vm663 = vcmask 261120
    %v665 = vsel %vm663, %v660, 0
    %667 = vmatprep.subr.mxu0 0.0
    %668 = vmatpush1.msra.mxu0 %v656
    %669 = vmatprep.subr.mxu0 0.0
    %670 = vmatpush1.msra.mxu0 %v657
    %671 = vmatprep.subr.mxu0 0.0
    %672 = vmatpush1.msra.mxu0 %v658
    %673 = vmatprep.subr.mxu0 0.0
    %674 = vmatpush1.msra.mxu0 %v659
    %675 = vmatprep.subr.mxu0 0.0
    %676 = vmatpush1.msra.mxu0 0.0
    %677 = vmatprep.subr.mxu0 0.0
    %678 = vmatpush1.msra.mxu0 0.0
    %679 = vmatprep.subr.mxu0 0.0
    %680 = vmatpush1.msra.mxu0 0.0
    %681 = vmatprep.subr.mxu0 0.0
    %682 = vmatpush1.msra.mxu0 0.0
    %683 = vmatprep.subr.mxu0 0.0
    %684 = vmatpush1.msra.mxu0 0.0
    %685 = vmatprep.subr.mxu0 0.0
    %686 = vmatpush1.msra.mxu0 0.0
    %687 = vmatprep.subr.mxu0 0.0
    %688 = vmatpush1.msra.mxu0 0.0
    %689 = vmatprep.subr.mxu0 0.0
    %690 = vmatpush1.msra.mxu0 0.0
    %691 = vmatprep.subr.mxu0 0.0
    %692 = vmatpush1.msra.mxu0 0.0
    %693 = vmatprep.subr.mxu0 0.0
    %694 = vmatpush1.msra.mxu0 0.0
    %695 = vmatprep.subr.mxu0 0.0
    %696 = vmatpush1.msra.mxu0 0.0
    %697 = vmatprep.subr.mxu0 0.0
    %698 = vmatpush1.msra.mxu0 0.0
    %699 = vmatprep.subr.mxu0 0.0
    %700 = vmatpush1.msra.mxu0 0.0
    %701 = vmatprep.subr.mxu0 0.0
    %702 = vmatpush1.msra.mxu0 0.0
    %703 = vmatprep.subr.mxu0 0.0
    %704 = vmatpush1.msra.mxu0 0.0
    %705 = vmatprep.subr.mxu0 0.0
    %706 = vmatpush1.msra.mxu0 0.0
    %707 = vmatprep.subr.mxu0 0.0
    %708 = vmatpush1.msra.mxu0 0.0
    %709 = vmatprep.subr.mxu0 0.0
    %710 = vmatpush1.msra.mxu0 0.0
    %711 = vmatprep.subr.mxu0 0.0
    %712 = vmatpush1.msra.mxu0 0.0
    %713 = vmatprep.subr.mxu0 0.0
    %714 = vmatpush1.msra.mxu0 0.0
    %715 = vmatprep.subr.mxu0 0.0
    %716 = vmatpush1.msra.mxu0 0.0
    %717 = vmatprep.subr.mxu0 0.0
    %718 = vmatpush1.msra.mxu0 0.0
    %719 = vmatprep.subr.mxu0 0.0
    %720 = vmatpush1.msra.mxu0 0.0
    %721 = vmatprep.subr.mxu0 0.0
    %722 = vmatpush1.msra.mxu0 0.0
    %723 = vmatprep.subr.mxu0 0.0
    %724 = vmatpush1.msra.mxu0 0.0
    %725 = vmatprep.subr.mxu0 0.0
    %726 = vmatpush1.msra.mxu0 0.0
    %727 = vmatprep.subr.mxu0 0.0
    %728 = vmatpush1.msra.mxu0 0.0
    %729 = vmatprep.subr.mxu0 0.0
    %730 = vmatpush1.msra.mxu0 0.0
    %731 = vmatprep.mubr.f32.mxu0 0.0
    %732 = vmatmul.mubr.f32.gmra.mrb[0].mxu0 %v665
    %v733 = vpop.f32.mrb[0].mxu0
    %v734 = vadd.f32 %v662, %v733
    %v735 = vpop.f32.mrb[0].mxu0
    %736 = vdwg.mxu0
    %v737 = vxor.u32 %v734, 2147483648
    %v738 = vmul.f32 %v737, 1.442695
    %v739 = vpow.pop %v738
    %v740 = vadd.f32 %v739, 1.0
    %v741 = vrcp.pop %v740
    %v742 = vmul.f32 1.0, %v741
    %743 = vst [vmem:[#allocation3] sm:$0x1] %v742
    // Predicated region
    $region38: #{tpu_custom_call.1} parent=1 // pred_check
      _
    $region39: #{tpu_custom_call.1} parent=1 // pred_check_branch
      %745 = sbr.rel (0) target = $region41
    $region40: #{tpu_custom_call.1} parent=1 // pred_region
      %s747 = ssub.s32 16, 16
      %748 = vsyncadd [#allocation4], %s747
      %s750 = sshll.u32 [#allocation3], 4
      %s751 = int_to_ptr.vmem [resolvable:$true] %s750
      %753 = dma.vmem_to_hbm [thread:$0]  %s751, 16, %s9, [#allocation4]
    $region41: #{tpu_custom_call.1} parent=1 // pred_fallthru
      _
    // Predicated region
    $region42: #{tpu_custom_call.1} parent=1 // pred_check
      _
    $region43: #{tpu_custom_call.1} parent=1 // pred_check_branch
      %755 = sbr.rel (0) target = $region45
    $region44: #{tpu_custom_call.1} parent=1 // pred_region
      %756 = dma.done [#allocation4], 16
    $region45: #{tpu_custom_call.1} parent=1 // pred_fallthru
      _
    %757 = vsyncpa [#allocation4], 1

</llo_original>
